<compile_context>
chip_gen: v7x
topology: tpu7x:2x2x1
jax: 0.10.0
libtpu: 0.0.40
codegen_flags: <defaults>
</compile_context>

<pallas_src>
import jax
import jax.numpy as jnp
from jax.experimental import pallas as pl
from jax.experimental.pallas import tpu as pltpu


def _round_up(x, m):
    return (x + m - 1) // m * m


def _patch_embed_kernel(x_ref, w_ref, b_ref, o_ref):
    # x_ref: (TM, K) patch rows.  w_ref: (K, E_pad) flattened conv weight
    # (VMEM-resident across the grid).  b_ref: (1, E_pad) bias.
    acc = jnp.dot(x_ref[...], w_ref[...], preferred_element_type=jnp.float32)
    o_ref[...] = (acc + b_ref[...].astype(jnp.float32)).astype(o_ref.dtype)


def patch_embedding(x, weight, bias, patch_size, *, tile_m=512, compute_dtype=None):
    """x: [B, C, H, W] (NCHW). weight: [E, C, P, P]. bias: [E].

    Returns [B, N, E] with N = (H//P)*(W//P), matching
    rearrange(Conv2d(C, E, P, stride=P)(x), 'b e n1 n2 -> b (n1 n2) e').
    """
    B, C, H, W = x.shape
    E = weight.shape[0]
    P = patch_size
    n1, n2 = H // P, W // P
    N = n1 * n2
    K = C * P * P
    BN = B * N

    # --- im2col: [B,C,H,W] -> [B*N, C*P*P] in (c, i, j) order (layout glue). ---
    # TODO(synk): fuse this transpose into the producer / take NHWC input to
    # avoid one extra full HBM read+write before the kernel.
    patches = x.reshape(B, C, n1, P, n2, P)
    patches = jnp.transpose(patches, (0, 2, 4, 1, 3, 5)).reshape(BN, K)

    # --- Padding for lane-dense output / even row tiling. ---
    E_pad = _round_up(E, 128)
    TM = min(tile_m, _round_up(BN, 8))
    BN_pad = _round_up(BN, TM)
    if BN_pad != BN:
        patches = jnp.pad(patches, ((0, BN_pad - BN), (0, 0)))

    w_flat = weight.reshape(E, K).T  # (K, E), matches (c, i, j) flatten order
    if E_pad != E:
        w_flat = jnp.pad(w_flat, ((0, 0), (0, E_pad - E)))
        b_row = jnp.pad(bias, (0, E_pad - E)).reshape(1, E_pad)
    else:
        b_row = bias.reshape(1, E_pad)

    in_dtype = jnp.dtype(compute_dtype) if compute_dtype is not None else patches.dtype
    patches_c = patches.astype(in_dtype)
    w_c = w_flat.astype(in_dtype)
    b_row = b_row.astype(jnp.float32)

    grid_m = BN_pad // TM
    out_dtype = x.dtype

    # --- VMEM budget (double-buffered tiles, lane/sublane rounded) + headroom. ---
    in_isz = jnp.dtype(in_dtype).itemsize
    out_isz = jnp.dtype(out_dtype).itemsize

    def _tile_bytes(rows, cols, itemsize):
        return _round_up(rows, 8) * _round_up(cols, 128) * itemsize

    vmem_est = (
        2 * _tile_bytes(TM, K, in_isz)          # patch tile, double-buffered
        + 2 * _tile_bytes(K, E_pad, in_isz)     # resident weight
        + 2 * _tile_bytes(1, E_pad, 4)          # resident bias
        + 2 * _tile_bytes(TM, E_pad, out_isz)   # output tile, double-buffered
    )
    vmem_limit = min(max(2 * vmem_est, 4 * 1024 * 1024), 64 * 1024 * 1024)

    cost = pl.CostEstimate(
        flops=2 * BN_pad * K * E_pad,
        transcendentals=0,
        bytes_accessed=(patches_c.size * in_isz
                        + w_c.size * in_isz
                        + b_row.size * 4
                        + BN_pad * E_pad * out_isz),
    )

    out = pl.pallas_call(
        _patch_embed_kernel,
        out_shape=jax.ShapeDtypeStruct((BN_pad, E_pad), out_dtype),
        grid_spec=pltpu.PrefetchScalarGridSpec(
            num_scalar_prefetch=0,
            grid=(grid_m,),
            in_specs=[
                pl.BlockSpec((TM, K), lambda i: (i, 0)),        # streamed rows
                pl.BlockSpec((K, E_pad), lambda i: (0, 0)),     # VMEM-resident
                pl.BlockSpec((1, E_pad), lambda i: (0, 0)),     # VMEM-resident
            ],
            out_specs=pl.BlockSpec((TM, E_pad), lambda i: (i, 0)),
        ),
        compiler_params=pltpu.CompilerParams(
            dimension_semantics=("parallel",),
            vmem_limit_bytes=vmem_limit,
        ),
        cost_estimate=cost,
    )(patches_c, w_c, b_row)

    out = out[:BN, :E]
    return out.reshape(B, N, E)


if __name__ == "__main__":
    patch_size = 7
    in_chans = 1
    embed_dim = 49

    key = jax.random.PRNGKey(0)
    kx, kw, kb = jax.random.split(key, 3)

    # Small, consistent shapes: B=2, C=1, H=W=28 -> N=16 patches of 7x7.
    B, H, W = 2, 28, 28
    x = jax.random.normal(kx, (B, in_chans, H, W), dtype=jnp.float32)

    # Deterministic parameter init (shapes match nn.Conv2d(in_chans, embed_dim, 7, 7)).
    fan_in = in_chans * patch_size * patch_size
    bound = 1.0 / (fan_in ** 0.5)
    weight = jax.random.uniform(
        kw, (embed_dim, in_chans, patch_size, patch_size),
        dtype=jnp.float32, minval=-bound, maxval=bound)
    bias = jax.random.uniform(
        kb, (embed_dim,), dtype=jnp.float32, minval=-bound, maxval=bound)

    out = patch_embedding(x, weight, bias, patch_size)
    out = jax.block_until_ready(out)

    # Sanity check against pure-JAX reference (lax conv).
    ref = jax.lax.conv_general_dilated(
        x, weight, window_strides=(patch_size, patch_size), padding="VALID",
        dimension_numbers=("NCHW", "OIHW", "NCHW")) + bias[None, :, None, None]
    n1, n2 = H // patch_size, W // patch_size
    ref = jnp.transpose(ref, (0, 2, 3, 1)).reshape(B, n1 * n2, embed_dim)
    assert out.shape == (B, n1 * n2, embed_dim)
    assert jnp.allclose(out, ref, atol=1e-5), "mismatch vs reference"

    print("KERNEL_OK")
</pallas_src>

<mosaic_0001>
module attributes {stable_mosaic.version = 11 : i64} {
  func.func @_patch_embed_kernel(%arg0: i32, %arg1: memref<32x49xf32, #tpu.memory_space<vmem>>, %arg2: memref<49x128xf32, #tpu.memory_space<vmem>>, %arg3: memref<1x128xf32, #tpu.memory_space<vmem>>, %arg4: memref<32x128xf32, #tpu.memory_space<vmem>>) attributes {dimension_semantics = [#tpu.dimension_semantics<parallel>], iteration_bounds = array<i64: 1>, scalar_prefetch = 0 : i64, scratch_operands = 0 : i64, tpu.core_type = #tpu.core_type<tc>, window_params = [{transform_indices = @transform_0, window_bounds = array<i64: 32, 49>}, {pipeline_mode = #tpu.pipeline_mode<synchronous>, transform_indices = @transform_1, window_bounds = array<i64: 49, 128>}, {pipeline_mode = #tpu.pipeline_mode<synchronous>, transform_indices = @transform_2, window_bounds = array<i64: 1, 128>}, {transform_indices = @transform_3, window_bounds = array<i64: 32, 128>}]} {
    %c0 = arith.constant 0 : index
    %c0_0 = arith.constant 0 : index
    %0 = vector.load %arg1[%c0, %c0_0] : memref<32x49xf32, #tpu.memory_space<vmem>>, vector<32x49xf32>
    %c0_1 = arith.constant 0 : index
    %c0_2 = arith.constant 0 : index
    %1 = vector.load %arg2[%c0_1, %c0_2] : memref<49x128xf32, #tpu.memory_space<vmem>>, vector<49x128xf32>
    %cst = arith.constant dense<0.000000e+00> : vector<32x128xf32>
    %2 = tpu.matmul %0, %1, %cst {dimension_numbers = #tpu.dot_dimension_numbers<[1], [0], [0], [1], [0, 0, 1, 1], [], []>} : vector<32x49xf32>, vector<49x128xf32>, vector<32x128xf32> -> vector<32x128xf32>
    %c0_3 = arith.constant 0 : index
    %c0_4 = arith.constant 0 : index
    %3 = vector.load %arg3[%c0_3, %c0_4] : memref<1x128xf32, #tpu.memory_space<vmem>>, vector<1x128xf32>
    %4 = vector.broadcast %3 : vector<1x128xf32> to vector<32x128xf32>
    %5 = arith.addf %2, %4 : vector<32x128xf32>
    %c0_5 = arith.constant 0 : index
    %c0_6 = arith.constant 0 : index
    %6 = vector.load %arg4[%c0_5, %c0_6] : memref<32x128xf32, #tpu.memory_space<vmem>>, vector<32x128xf32>
    tpu.vector_store %arg4[%c0_5, %c0_6], %5 {strides = array<i32>} : memref<32x128xf32, #tpu.memory_space<vmem>>, vector<32x128xf32>,
    return
  }
  func.func @transform_0(%arg0: i32) -> (i32, i32) {
    %c0_i32 = arith.constant 0 : i32
    %c0_i32_0 = arith.constant 0 : i32
    return %arg0, %c0_i32 : i32, i32
  }
  func.func @transform_1(%arg0: i32) -> (i32, i32) {
    %c0_i32 = arith.constant 0 : i32
    %c0_i32_0 = arith.constant 0 : i32
    %c0_i32_1 = arith.constant 0 : i32
    return %c0_i32, %c0_i32_0 : i32, i32
  }
  func.func @transform_2(%arg0: i32) -> (i32, i32) {
    %c0_i32 = arith.constant 0 : i32
    %c0_i32_0 = arith.constant 0 : i32
    %c0_i32_1 = arith.constant 0 : i32
    return %c0_i32, %c0_i32_0 : i32, i32
  }
  func.func @transform_3(%arg0: i32) -> (i32, i32) {
    %c0_i32 = arith.constant 0 : i32
    %c0_i32_0 = arith.constant 0 : i32
    return %arg0, %c0_i32 : i32, i32
  }
}

</mosaic_0001>

<llo_original>
// kernel: tpu_custom_call.1
$region0: #{tpu_custom_call.1}
  #allocation0 [shape = 'u32[]', space=smem, size = 0x4, offset = 0x4, fixed_abs, tag = 'smem constant byte address 0x4 - core index']
  #allocation1 [shape = 'u32[144,128]{1,0:T(1,128)}', space=vmem, size = 0x12000, scoped, tag = 'internal scratch']
  %s0 = inlined_call_operand.hbm [shape: f32[32,49], index: 0, kind: input, shape index: {}]
  %s1 = inlined_call_operand.hbm [shape: f32[49,128], index: 1, kind: input, shape index: {}]
  %s2 = inlined_call_operand.vmem [shape: f32[1,128], index: 2, kind: input, shape index: {}]
  %s3 = inlined_call_operand.hbm [shape: f32[32,128], index: 3, kind: output, shape index: {}]
  %s4 = sld [smem:[#allocation0]]
  $region30: #{tpu_custom_call.1} parent=0
    _
  %s6 = ssub.s32 1, %s4
  %s7 = scalar_select 0, %s6, %s4
  $region1: #{tpu_custom_call.1} parent=0
    #allocation2 [shape = 'u8[16384]{0}', space=vmem, size = 0x4000, scoped, tag = 'input window, operand 0, single buffered']
    #allocation3 [shape = 's32[1]{0}', space=sflag, size = 0x4, scoped, tag = 'scoped memory for tpu_custom_call.1']
    #allocation4 [shape = 's32[1]{0}', space=sflag, size = 0x4, scoped, tag = 'scoped memory for tpu_custom_call.1']
    #allocation5 [shape = 'u8[28672]{0}', space=vmem, size = 0x7000, scoped, tag = 'input window, operand 1, single buffered']
    #allocation6 [shape = 's32[1]{0}', space=sflag, size = 0x4, scoped, tag = 'scoped memory for tpu_custom_call.1']
    #allocation7 [shape = 'u8[16384]{0}', space=vmem, size = 0x4000, scoped, tag = 'output window, operand 0, single buffered']
    %8 = vsyncpa [#allocation3], 0
    %9 = vsyncpa [#allocation6], 0
    %10 = vsyncpa [#allocation4], 0
    // Predicated region
    $region2: #{tpu_custom_call.1} parent=1 // pred_check
      _
    $region3: #{tpu_custom_call.1} parent=1 // pred_check_branch
      %12 = sbr.rel (0) target = $region5
    $region4: #{tpu_custom_call.1} parent=1 // pred_region
      %s14 = ssub.s32 512, 512
      %15 = vsyncadd [#allocation3], %s14
      %s16 = sshll.u32 [#allocation2], 4
      %s17 = int_to_ptr.vmem [resolvable:$true] %s16
      %22 = dma.hbm_to_vmem [thread:$0]  %s0, 512, %s17, [#allocation3], 128, 128, 8
    $region5: #{tpu_custom_call.1} parent=1 // pred_fallthru
      _
    // Predicated region
    $region6: #{tpu_custom_call.1} parent=1 // pred_check
      _
    $region7: #{tpu_custom_call.1} parent=1 // pred_check_branch
      %24 = sbr.rel (0) target = $region9
    $region8: #{tpu_custom_call.1} parent=1 // pred_region
      %s26 = ssub.s32 896, 896
      %27 = vsyncadd [#allocation6], %s26
      %s28 = sshll.u32 [#allocation5], 4
      %s29 = int_to_ptr.vmem [resolvable:$true] %s28
      %34 = dma.hbm_to_vmem [thread:$0]  %s1, 896, %s29, [#allocation6], 128, 128, 8
    $region9: #{tpu_custom_call.1} parent=1 // pred_fallthru
      _
    // Predicated region
    $region10: #{tpu_custom_call.1} parent=1 // pred_check
      _
    $region11: #{tpu_custom_call.1} parent=1 // pred_check_branch
      %36 = sbr.rel (0) target = $region13
    $region12: #{tpu_custom_call.1} parent=1 // pred_region
      _
    $region13: #{tpu_custom_call.1} parent=1 // pred_fallthru
      _
    // Predicated region
    $region14: #{tpu_custom_call.1} parent=1 // pred_check
      _
    $region15: #{tpu_custom_call.1} parent=1 // pred_check_branch
      %38 = sbr.rel (0) target = $region17
    $region16: #{tpu_custom_call.1} parent=1 // pred_region
      %39 = dma.done [#allocation3], 512
    $region17: #{tpu_custom_call.1} parent=1 // pred_fallthru
      _
    // Predicated region
    $region18: #{tpu_custom_call.1} parent=1 // pred_check
      _
    $region19: #{tpu_custom_call.1} parent=1 // pred_check_branch
      %41 = sbr.rel (0) target = $region21
    $region20: #{tpu_custom_call.1} parent=1 // pred_region
      %42 = dma.done [#allocation6], 896
    $region21: #{tpu_custom_call.1} parent=1 // pred_fallthru
      _
    %v43 = vld [vmem:[#allocation2] sm:$0xff]
    %v44 = vld [vmem:[#allocation2 + $0x8] sm:$0xff]
    %v45 = vld [vmem:[#allocation2 + $0x10] sm:$0xff]
    %v46 = vld [vmem:[#allocation2 + $0x18] sm:$0xff]
    %v47 = vld [vmem:[#allocation5] sm:$0xff]
    %v48 = vld [vmem:[#allocation5 + $0x8] sm:$0xff]
    %v49 = vld [vmem:[#allocation5 + $0x10] sm:$0xff]
    %v50 = vld [vmem:[#allocation5 + $0x18] sm:$0xff]
    %v51 = vld [vmem:[#allocation5 + $0x20] sm:$0xff]
    %v52 = vld [vmem:[#allocation5 + $0x28] sm:$0xff]
    %v53 = vld [vmem:[#allocation5 + $0x30] sm:$0x1]
    %v54 = vld [vmem:[%s2] sm:$0x1]
    %v56 = vlaneseq
    %v57 = vshrl.u32 %v56, 7
    %v58 = vsub.s32 0, %v57
    %v59 = vrot.slane %v54, %v58
    %vm61 = vcmask 400384
    %v63 = vsel %vm61, %v43, 0
    %v66 = vsel %vm61, %v44, 0
    %v69 = vsel %vm61, %v45, 0
    %v72 = vsel %vm61, %v46, 0
    %vm74 = vcmask 1040384
    %v76 = vsel %vm74, %v53, 0
    %78 = vmatprep.subr.mxu0 0.0
    %79 = vmatpush1.msra.mxu0 %v47
    %80 = vmatprep.subr.mxu0 0.0
    %81 = vmatpush1.msra.mxu0 %v48
    %82 = vmatprep.subr.mxu0 0.0
    %83 = vmatpush1.msra.mxu0 %v49
    %84 = vmatprep.subr.mxu0 0.0
    %85 = vmatpush1.msra.mxu0 %v50
    %86 = vmatprep.subr.mxu0 0.0
    %87 = vmatpush1.msra.mxu0 %v51
    %88 = vmatprep.subr.mxu0 0.0
    %89 = vmatpush1.msra.mxu0 %v52
    %90 = vmatprep.subr.mxu0 0.0
    %91 = vmatpush1.msra.mxu0 %v76
    %92 = vmatprep.subr.mxu0 0.0
    %93 = vmatpush1.msra.mxu0 0.0
    %94 = vmatprep.subr.mxu0 0.0
    %95 = vmatpush1.msra.mxu0 0.0
    %96 = vmatprep.subr.mxu0 0.0
    %97 = vmatpush1.msra.mxu0 0.0
    %98 = vmatprep.subr.mxu0 0.0
    %99 = vmatpush1.msra.mxu0 0.0
    %100 = vmatprep.subr.mxu0 0.0
    %101 = vmatpush1.msra.mxu0 0.0
    %102 = vmatprep.subr.mxu0 0.0
    %103 = vmatpush1.msra.mxu0 0.0
    %104 = vmatprep.subr.mxu0 0.0
    %105 = vmatpush1.msra.mxu0 0.0
    %106 = vmatprep.subr.mxu0 0.0
    %107 = vmatpush1.msra.mxu0 0.0
    %108 = vmatprep.subr.mxu0 0.0
    %109 = vmatpush1.msra.mxu0 0.0
    %110 = vmatprep.subr.mxu0 0.0
    %111 = vmatpush1.msra.mxu0 0.0
    %112 = vmatprep.subr.mxu0 0.0
    %113 = vmatpush1.msra.mxu0 0.0
    %114 = vmatprep.subr.mxu0 0.0
    %115 = vmatpush1.msra.mxu0 0.0
    %116 = vmatprep.subr.mxu0 0.0
    %117 = vmatpush1.msra.mxu0 0.0
    %118 = vmatprep.subr.mxu0 0.0
    %119 = vmatpush1.msra.mxu0 0.0
    %120 = vmatprep.subr.mxu0 0.0
    %121 = vmatpush1.msra.mxu0 0.0
    %122 = vmatprep.subr.mxu0 0.0
    %123 = vmatpush1.msra.mxu0 0.0
    %124 = vmatprep.subr.mxu0 0.0
    %125 = vmatpush1.msra.mxu0 0.0
    %126 = vmatprep.subr.mxu0 0.0
    %127 = vmatpush1.msra.mxu0 0.0
    %128 = vmatprep.subr.mxu0 0.0
    %129 = vmatpush1.msra.mxu0 0.0
    %130 = vmatprep.subr.mxu0 0.0
    %131 = vmatpush1.msra.mxu0 0.0
    %132 = vmatprep.subr.mxu0 0.0
    %133 = vmatpush1.msra.mxu0 0.0
    %134 = vmatprep.subr.mxu0 0.0
    %135 = vmatpush1.msra.mxu0 0.0
    %136 = vmatprep.subr.mxu0 0.0
    %137 = vmatpush1.msra.mxu0 0.0
    %138 = vmatprep.subr.mxu0 0.0
    %139 = vmatpush1.msra.mxu0 0.0
    %140 = vmatprep.subr.mxu0 0.0
    %141 = vmatpush1.msra.mxu0 0.0
    %142 = vmatprep.mubr.f32.mxu0 0.0
    %143 = vmatmul.mubr.f32.gmra.mrb[0].mxu0 %v63
    %v144 = vpop.f32.mrb[0].mxu0
    %v145 = vadd.f32 %v59, %v144
    %v146 = vpop.f32.mrb[0].mxu0
    %147 = vmatprep.mubr.f32.mxu0 0.0
    %148 = vmatmul.mubr.f32.gmra.mrb[0].mxu0 %v66
    %v149 = vpop.f32.mrb[0].mxu0
    %v150 = vadd.f32 %v59, %v149
    %v151 = vpop.f32.mrb[0].mxu0
    %152 = vmatprep.mubr.f32.mxu0 0.0
    %153 = vmatmul.mubr.f32.gmra.mrb[0].mxu0 %v69
    %v154 = vpop.f32.mrb[0].mxu0
    %v155 = vadd.f32 %v59, %v154
    %v156 = vpop.f32.mrb[0].mxu0
    %157 = vmatprep.mubr.f32.mxu0 0.0
    %158 = vmatmul.mubr.f32.gmra.mrb[0].mxu0 %v72
    %v159 = vpop.f32.mrb[0].mxu0
    %v160 = vadd.f32 %v59, %v159
    %v161 = vpop.f32.mrb[0].mxu0
    %162 = vdwg.mxu0
    %163 = vst [vmem:[#allocation7] sm:$0xff] %v145
    %164 = vst [vmem:[#allocation7 + $0x8] sm:$0xff] %v150
    %165 = vst [vmem:[#allocation7 + $0x10] sm:$0xff] %v155
    %166 = vst [vmem:[#allocation7 + $0x18] sm:$0xff] %v160
    // Predicated region
    $region22: #{tpu_custom_call.1} parent=1 // pred_check
      _
    $region23: #{tpu_custom_call.1} parent=1 // pred_check_branch
      %168 = sbr.rel (0) target = $region25
    $region24: #{tpu_custom_call.1} parent=1 // pred_region
      %s170 = ssub.s32 512, 512
      %171 = vsyncadd [#allocation4], %s170
      %s172 = sshll.u32 [#allocation7], 4
      %s173 = int_to_ptr.vmem [resolvable:$true] %s172
      %178 = dma.vmem_to_hbm [thread:$0]  %s173, 512, %s3, [#allocation4], 128, 128, 8
    $region25: #{tpu_custom_call.1} parent=1 // pred_fallthru
      _
    // Predicated region
    $region26: #{tpu_custom_call.1} parent=1 // pred_check
      _
    $region27: #{tpu_custom_call.1} parent=1 // pred_check_branch
      %180 = sbr.rel (0) target = $region29
    $region28: #{tpu_custom_call.1} parent=1 // pred_region
      %181 = dma.done [#allocation4], 512
    $region29: #{tpu_custom_call.1} parent=1 // pred_fallthru
      _
    %182 = vsyncpa [#allocation3], 1
    %183 = vsyncpa [#allocation6], 1
    %184 = vsyncpa [#allocation4], 1

</llo_original>
